<compile_context>
chip_gen: v5e
topology: v5e:2x2
jax: 0.10.0
libtpu: 0.0.40
codegen_flags: <defaults>
</compile_context>

<pallas_src>
import functools

import jax
import jax.numpy as jnp
from jax import lax
from jax.experimental import pallas as pl
from jax.experimental.pallas import tpu as pltpu


_SUBLANES = 8
_LANES = 128
_NBUF = 8            # in-flight row DMAs for the HBM gather ring
_ONEHOT_CHUNK = 256  # V-chunk size for the one-hot contraction


def _round_up(x, m):
    return ((x + m - 1) // m) * m


def _vmem_capacity_bytes():
    # v5e/v6e: 128 MiB per TensorCore, v7x: 64 MiB.  Query when possible,
    # fall back to the smallest (v7x) so residency decisions stay safe.
    try:
        return int(pltpu.get_tpu_info().vmem_capacity_bytes)
    except Exception:  # pragma: no cover - conservative fallback
        return 64 * 1024 * 1024


def _onehot_max_v(dtype):
    # The one-hot path burns TOK*V*D MACs for a gather; keep it for small V.
    # 4-byte tables get a lower cutoff (f32 MXU is multi-pass on older chips).
    return 1024 if jnp.dtype(dtype).itemsize >= 4 else 2048


def _vmem_limit_bytes(needed_bytes, cap):
    # Always pass an explicit limit derived from the actual buffers (v5e's
    # default scoped limit is only 16 MiB), with headroom, capped below the
    # physical capacity.
    return int(min(0.9 * cap, max(needed_bytes + (16 << 20), 64 << 20)))


# ----------------------------------------------------------------------------
# Kernels
# ----------------------------------------------------------------------------
def _copy_table_once(emb_hbm, table_vmem, table_sem):
    """Copy the whole table HBM -> VMEM scratch on the first grid step only."""
    @pl.when(pl.program_id(0) == 0)
    def _():
        cp = pltpu.make_async_copy(emb_hbm, table_vmem, table_sem.at[0])
        cp.start()
        cp.wait()


def _onehot_gather_kernel(idx_ref, emb_hbm, out_ref, table_vmem, table_sem):
    """Single-buffered VMEM-resident table; chunked one-hot @ table on the MXU."""
    _copy_table_once(emb_hbm, table_vmem, table_sem)

    tok, d = out_ref.shape
    vocab = table_vmem.shape[0]
    ids = idx_ref[...]                                           # (TOK, 1) int32

    acc = jnp.zeros((tok, d), jnp.float32)
    # Chunk the contraction so the (TOK, V) one-hot never fully materializes
    # and VALU one-hot construction interleaves with MXU matmul.
    for c0 in range(0, vocab, _ONEHOT_CHUNK):
        ch = min(_ONEHOT_CHUNK, vocab - c0)
        iota = c0 + lax.broadcasted_iota(jnp.int32, (tok, ch), 1)
        one_hot = (ids == iota).astype(table_vmem.dtype)         # (TOK, ch)
        acc = acc + jnp.dot(one_hot, table_vmem[pl.ds(c0, ch), :],
                            preferred_element_type=jnp.float32)
    out_ref[...] = acc.astype(out_ref.dtype)


def _resident_rows_kernel(idx_ref, emb_hbm, out_ref, table_vmem, table_sem):
    """Single-buffered VMEM-resident table; unrolled per-token row copies."""
    _copy_table_once(emb_hbm, table_vmem, table_sem)

    tok = out_ref.shape[0]
    base = pl.program_id(0) * tok

    def body(t, carry):
        row = idx_ref[base + t]                                  # SMEM scalar read
        out_ref[pl.ds(t, 1), :] = table_vmem[pl.ds(row, 1), :]   # lane-dense row
        return carry

    lax.fori_loop(0, tok, body, 0, unroll=8)


def _ring_row_gather(src_ref, idx_ref, base, dst_ref, sems):
    """Gather dst_ref[t, :] = src_ref[idx_ref[base + t], :] for t in [0, TOK)
    using a ring of len(sems) in-flight row DMAs."""
    tok = dst_ref.shape[0]
    nbuf = sems.shape[0]

    def issue(t):
        row = idx_ref[base + t]
        pltpu.make_async_copy(src_ref.at[pl.ds(row, 1), :],
                              dst_ref.at[pl.ds(t, 1), :],
                              sems.at[t % nbuf]).start()

    def wait_for(t):
        # Dummy src slice of matching (1, D) size; only sem + size matter.
        pltpu.make_async_copy(src_ref.at[pl.ds(0, 1), :],
                              dst_ref.at[pl.ds(t, 1), :],
                              sems.at[t % nbuf]).wait()

    # Prime nbuf DMAs (wrapper guarantees tok >= nbuf).
    for t in range(nbuf):                       # static
        issue(t)

    # Steady state: wait for row t, reuse its slot for row t + nbuf.
    def body(t, carry):
        wait_for(t)
        issue(t + nbuf)
        return carry

    lax.fori_loop(0, tok - nbuf, body, 0, unroll=8)

    # Drain the last nbuf in-flight DMAs.
    for t in range(tok - nbuf, tok):            # static
        wait_for(t)


def _hbm_rows_kernel(idx_ref, emb_hbm, out_ref, row_buf, sems):
    """Non-resident table: manual multi-DMA row gather from HBM."""
    tok = out_ref.shape[0]
    base = pl.program_id(0) * tok
    _ring_row_gather(emb_hbm, idx_ref, base, row_buf, sems)
    out_ref[...] = row_buf[...]                 # one dense (TOK, D_pad) store


# ----------------------------------------------------------------------------
# pallas_call builders (all tables are (V_pad, D_pad), ids are (N_pad,) int32)
# ----------------------------------------------------------------------------
def _embed_resident_onehot(idx_flat, table, tok, cap):
    n_pad = idx_flat.shape[0]
    vp, dp = table.shape
    it = table.dtype.itemsize
    nblocks = n_pad // tok
    idx2d = idx_flat.reshape(n_pad, 1)

    needed = (vp * dp * it                       # resident table (single copy)
              + 2 * tok * dp * it                # double-buffered output block
              + 2 * tok * _LANES * 4             # double-buffered (TOK,1) ids
              + tok * dp * 4                     # f32 accumulator
              + tok * _ONEHOT_CHUNK * 4)         # one-hot chunk
    grid_spec = pltpu.PrefetchScalarGridSpec(
        num_scalar_prefetch=0,
        grid=(nblocks,),
        in_specs=[
            pl.BlockSpec((tok, 1), lambda i: (i, 0)),     # token-id block (VMEM)
            pl.BlockSpec(memory_space=pl.ANY),            # table stays in HBM
        ],
        out_specs=pl.BlockSpec((tok, dp), lambda i: (i, 0)),
        scratch_shapes=[
            pltpu.VMEM((vp, dp), table.dtype),            # resident table copy
            pltpu.SemaphoreType.DMA((1,)),
        ],
    )
    return pl.pallas_call(
        _onehot_gather_kernel,
        out_shape=jax.ShapeDtypeStruct((n_pad, dp), table.dtype),
        grid_spec=grid_spec,
        compiler_params=pltpu.CompilerParams(
            # copy-once resident table requires a sequential single-core grid
            dimension_semantics=("arbitrary",),
            vmem_limit_bytes=_vmem_limit_bytes(needed, cap)),
    )(idx2d, table)


def _embed_resident_rows(idx_flat, table, tok, cap):
    n_pad = idx_flat.shape[0]
    vp, dp = table.shape
    it = table.dtype.itemsize
    nblocks = n_pad // tok

    needed = vp * dp * it + 2 * tok * dp * it
    grid_spec = pltpu.PrefetchScalarGridSpec(
        num_scalar_prefetch=1,                             # ids land in SMEM
        grid=(nblocks,),
        in_specs=[pl.BlockSpec(memory_space=pl.ANY)],      # table stays in HBM
        out_specs=pl.BlockSpec((tok, dp), lambda i, idx: (i, 0)),
        scratch_shapes=[
            pltpu.VMEM((vp, dp), table.dtype),             # resident table copy
            pltpu.SemaphoreType.DMA((1,)),
        ],
    )
    return pl.pallas_call(
        _resident_rows_kernel,
        out_shape=jax.ShapeDtypeStruct((n_pad, dp), table.dtype),
        grid_spec=grid_spec,
        compiler_params=pltpu.CompilerParams(
            dimension_semantics=("arbitrary",),
            vmem_limit_bytes=_vmem_limit_bytes(needed, cap)),
    )(idx_flat, table)


def _embed_hbm_rows(idx_flat, table, tok, cap):
    n_pad = idx_flat.shape[0]
    vp, dp = table.shape
    it = table.dtype.itemsize
    nblocks = n_pad // tok
    nbuf = min(_NBUF, tok)

    needed = 3 * tok * dp * it                   # 2x out block + row scratch
    grid_spec = pltpu.PrefetchScalarGridSpec(
        num_scalar_prefetch=1,
        grid=(nblocks,),
        in_specs=[pl.BlockSpec(memory_space=pl.ANY)],
        out_specs=pl.BlockSpec((tok, dp), lambda i, idx: (i, 0)),
        scratch_shapes=[
            pltpu.VMEM((tok, dp), table.dtype),            # gathered block
            pltpu.SemaphoreType.DMA((nbuf,)),
        ],
    )
    return pl.pallas_call(
        _hbm_rows_kernel,
        out_shape=jax.ShapeDtypeStruct((n_pad, dp), table.dtype),
        grid_spec=grid_spec,
        compiler_params=pltpu.CompilerParams(
            dimension_semantics=("parallel",),             # blocks independent
            vmem_limit_bytes=_vmem_limit_bytes(needed, cap)),
    )(idx_flat, table)


# ----------------------------------------------------------------------------
# Public wrapper (== nn.Embedding(V, D)(x))
# ----------------------------------------------------------------------------
def embedder_forward(indices, embed_table, *, tok_block=128, force_path=None):
    """Equivalent of `nn.Embedding(V, D)(indices)` (forward only).

    indices:     integer array with arbitrary leading shape (e.g. (B, S))
    embed_table: (V, D) embedding weights (f32 or bf16)
    returns:     embed_table.dtype array of shape indices.shape + (D,)
    """
    V, D = embed_table.shape
    lead_shape = indices.shape
    flat = indices.reshape(-1).astype(jnp.int32)
    # nn.Embedding requires ids in [0, V); clamp so a bad id can never turn
    # into an out-of-bounds DMA inside the kernel.
    flat = jnp.clip(flat, 0, V - 1)
    N = flat.shape[0]

    # Pad D to a lane multiple and V to a sublane multiple: every output store
    # becomes an unmasked, lane-dense vst and every table tile is aligned.
    d_pad = _round_up(D, _LANES)
    v_pad = _round_up(V, _SUBLANES)
    table = embed_table
    if (v_pad, d_pad) != (V, D):
        table = jnp.pad(embed_table, ((0, v_pad - V), (0, d_pad - D)))

    it = table.dtype.itemsize
    table_bytes = v_pad * d_pad * it
    cap = _vmem_capacity_bytes()

    tok = max(_SUBLANES,
              min(_round_up(tok_block, _SUBLANES), _round_up(N, _SUBLANES)))
    n_pad = _round_up(N, tok)
    flat_p = jnp.pad(flat, (0, n_pad - N))      # pad with id 0 (valid row)

    # Residency budget: table is single-buffered now, so ~0.6 * capacity minus
    # the per-step working set (out blocks, ids, one-hot/acc intermediates).
    working = 2 * tok * d_pad * it + 2 * tok * _LANES * 4 + tok * d_pad * 4
    resident_ok = (table_bytes + working) <= int(0.6 * cap)

    path = force_path
    if path is None:
        if resident_ok:
            path = "onehot" if v_pad <= _onehot_max_v(table.dtype) else "resident_rows"
        else:
            path = "hbm_rows"
    # TODO(synk): for very small N on v7x it can be cheaper to skip Pallas and
    #             use jnp.take (table streaming dominates); not auto-dispatched.

    if path == "onehot":
        out_flat = _embed_resident_onehot(flat_p, table, tok, cap)
    elif path == "resident_rows":
        out_flat = _embed_resident_rows(flat_p, table, tok, cap)
    elif path == "hbm_rows":
        out_flat = _embed_hbm_rows(flat_p, table, tok, cap)
    else:
        raise ValueError(f"unknown path {path!r}")

    out_flat = out_flat[:N, :D]
    return out_flat.reshape(*lead_shape, D)


if __name__ == "__main__":
    # Small shapes consistent with the module: vocab_size=32, d_model=32,
    # token indices of shape (batch=2, seq=8).
    vocab_size = 32
    d_model = 32
    B, S = 2, 8

    key = jax.random.PRNGKey(0)
    k_emb, k_idx = jax.random.split(key)

    # nn.Embedding default init: weight ~ N(0, 1), shape (vocab_size, d_model).
    embed_table = jax.random.normal(k_emb, (vocab_size, d_model), dtype=jnp.float32)
    x = jax.random.randint(k_idx, (B, S), 0, vocab_size, dtype=jnp.int32)

    ref = jnp.take(embed_table, x, axis=0)

    # Exercise all three gather paths at this small size (the review asked to
    # verify the fallback paths actually compile), then the default dispatch.
    for path in ("onehot", "resident_rows", "hbm_rows"):
        out = embedder_forward(x, embed_table, force_path=path)
        out = jax.block_until_ready(out)
        assert out.shape == (B, S, d_model), (path, out.shape)
        assert jnp.allclose(out, ref), f"mismatch vs reference gather on {path}"

    out = jax.block_until_ready(embedder_forward(x, embed_table))
    assert out.shape == (B, S, d_model), out.shape
    assert jnp.allclose(out, ref), "mismatch vs reference gather (default path)"

    print("KERNEL_OK")
</pallas_src>

<mosaic_0001>
module attributes {stable_mosaic.version = 11 : i64} {
  func.func @_onehot_gather_kernel(%arg0: i32, %arg1: memref<16x1xi32, #tpu.memory_space<vmem>>, %arg2: memref<32x128xf32, #tpu.memory_space<any>>, %arg3: memref<16x128xf32, #tpu.memory_space<vmem>>, %arg4: memref<32x128xf32, #tpu.memory_space<vmem>>, %arg5: memref<1x!tpu.dma_semaphore, #tpu.memory_space<semaphore_mem>>) attributes {dimension_semantics = [#tpu.dimension_semantics<arbitrary>], iteration_bounds = array<i64: 1>, scalar_prefetch = 0 : i64, scratch_operands = 2 : i64, tpu.core_type = #tpu.core_type<tc>, window_params = [{transform_indices = @transform_0, window_bounds = array<i64: 16, 1>}, {}, {transform_indices = @transform_2, window_bounds = array<i64: 16, 128>}]} {
    %c0_i32 = arith.constant 0 : i32
    %0 = arith.cmpi eq, %arg0, %c0_i32 : i32
    %1 = arith.extui %0 : i1 to i32
    %c0_i32_0 = arith.constant 0 : i32
    %2 = arith.cmpi ne, %1, %c0_i32_0 : i32
    scf.if %2 {
      %c0_i32_8 = arith.constant 0 : i32
      %16 = tpu.memref_slice %arg5[%c0_i32_8] : memref<1x!tpu.dma_semaphore, #tpu.memory_space<semaphore_mem>> -> memref<1x!tpu.dma_semaphore, #tpu.memory_space<semaphore_mem>>
      %17 = tpu.memref_squeeze %16 : memref<1x!tpu.dma_semaphore, #tpu.memory_space<semaphore_mem>> -> memref<!tpu.dma_semaphore, #tpu.memory_space<semaphore_mem>>
      tpu.enqueue_dma source(%arg2 : memref<32x128xf32, #tpu.memory_space<any>>) target(%arg4 : memref<32x128xf32, #tpu.memory_space<vmem>>) target_semaphore(%17 : memref<!tpu.dma_semaphore, #tpu.memory_space<semaphore_mem>>)
      %c0_i32_9 = arith.constant 0 : i32
      %18 = tpu.memref_slice %arg5[%c0_i32_9] : memref<1x!tpu.dma_semaphore, #tpu.memory_space<semaphore_mem>> -> memref<1x!tpu.dma_semaphore, #tpu.memory_space<semaphore_mem>>
      %19 = tpu.memref_squeeze %18 : memref<1x!tpu.dma_semaphore, #tpu.memory_space<semaphore_mem>> -> memref<!tpu.dma_semaphore, #tpu.memory_space<semaphore_mem>>
      tpu.wait_dma2 semaphore(%19 : memref<!tpu.dma_semaphore, #tpu.memory_space<semaphore_mem>>) src(%arg2 : memref<32x128xf32, #tpu.memory_space<any>>) dst(%arg4 : memref<32x128xf32, #tpu.memory_space<vmem>>)
    } else {
    }
    %c0 = arith.constant 0 : index
    %c0_1 = arith.constant 0 : index
    %3 = vector.load %arg1[%c0, %c0_1] : memref<16x1xi32, #tpu.memory_space<vmem>>, vector<16x1xi32>
    %cst = arith.constant 0.000000e+00 : f32
    %4 = vector.broadcast %cst : f32 to vector<16x128xf32>
    %5 = tpu.iota {dimensions = array<i32: 1>} : vector<16x32xi32>
    %c0_i32_2 = arith.constant 0 : i32
    %6 = vector.broadcast %c0_i32_2 : i32 to vector<16x32xi32>
    %7 = arith.addi %6, %5 : vector<16x32xi32>
    %8 = vector.broadcast %3 : vector<16x1xi32> to vector<16x32xi32>
    %9 = arith.cmpi eq, %8, %7 : vector<16x32xi32>
    %10 = arith.extui %9 : vector<16x32xi1> to vector<16x32xi32>
    %11 = arith.sitofp %10 : vector<16x32xi32> to vector<16x32xf32>
    %c0_3 = arith.constant 0 : index
    %c0_4 = arith.constant 0 : index
    %12 = vector.load %arg4[%c0_3, %c0_4] : memref<32x128xf32, #tpu.memory_space<vmem>>, vector<32x128xf32>
    %cst_5 = arith.constant dense<0.000000e+00> : vector<16x128xf32>
    %13 = tpu.matmul %11, %12, %cst_5 {dimension_numbers = #tpu.dot_dimension_numbers<[1], [0], [0], [1], [0, 0, 1, 1], [], []>} : vector<16x32xf32>, vector<32x128xf32>, vector<16x128xf32> -> vector<16x128xf32>
    %14 = arith.addf %4, %13 : vector<16x128xf32>
    %c0_6 = arith.constant 0 : index
    %c0_7 = arith.constant 0 : index
    %15 = vector.load %arg3[%c0_6, %c0_7] : memref<16x128xf32, #tpu.memory_space<vmem>>, vector<16x128xf32>
    tpu.vector_store %arg3[%c0_6, %c0_7], %14 {strides = array<i32>} : memref<16x128xf32, #tpu.memory_space<vmem>>, vector<16x128xf32>,
    return
  }
  func.func @transform_0(%arg0: i32) -> (i32, i32) {
    %c0_i32 = arith.constant 0 : i32
    %c0_i32_0 = arith.constant 0 : i32
    return %arg0, %c0_i32 : i32, i32
  }
  func.func @transform_2(%arg0: i32) -> (i32, i32) {
    %c0_i32 = arith.constant 0 : i32
    %c0_i32_0 = arith.constant 0 : i32
    return %arg0, %c0_i32 : i32, i32
  }
}

</mosaic_0001>

<llo_original>
// kernel: tpu_custom_call.1
$region0: #{tpu_custom_call.1}
  #allocation0 [shape = 'u32[]', space=smem, size = 0x4, offset = 0x4, fixed_abs, tag = 'smem constant byte address 0x4 - core index']
  #allocation1 [shape = 'u32[72,128]{1,0:T(1,128)}', space=vmem, size = 0x9000, scoped, tag = 'internal scratch']
  #allocation2 [shape = 'f32[32,128]{1,0:T(8,128)}', space=vmem, size = 0x4000, scoped, tag = 'scratch operand']
  #allocation3 [shape = 's32[1]{0}', space=sflag, size = 0x4, scoped, tag = 'scratch operand']
  #allocation6 [shape = 's32[]', space=sflag, size = 0x4, offset = 0, fixed_abs, tag = 'sflag constant byte address 0x0 - dummy sync flag']
  #allocation7 [shape = 's32[]', space=sflag, size = 0x4, offset = 0, fixed_abs, tag = 'sflag constant byte address 0x0 - dummy sync flag']
  #allocation8 [shape = 'u32[]', space=smem, size = 0x4, offset = 0x44, fixed_abs, tag = 'smem constant byte address 0x44 - assertion arg 0']
  #allocation9 [shape = 'u32[]', space=smem, size = 0x4, offset = 0x48, fixed_abs, tag = 'smem constant byte address 0x48 - assertion arg 1']
  %s0 = inlined_call_operand.vmem [shape: s32[16,1], index: 0, kind: input, shape index: {}]
  %s1 = inlined_call_operand.hbm [shape: f32[32,128], index: 1, kind: input, shape index: {}]
  %s2 = inlined_call_operand.hbm [shape: f32[16,128], index: 2, kind: output, shape index: {}]
  %s3 = sld [smem:[#allocation0]]
  $region22: #{tpu_custom_call.1} parent=0
    _
  %s5 = ssub.s32 1, %s3
  %s6 = scalar_select 0, %s5, %s3
  $region1: #{tpu_custom_call.1} parent=0
    #allocation4 [shape = 'u8[8192]{0}', space=vmem, size = 0x2000, scoped, tag = 'output window, operand 0, single buffered']
    #allocation5 [shape = 's32[1]{0}', space=sflag, size = 0x4, scoped, tag = 'scoped memory for tpu_custom_call.1']
    %7 = vsyncpa [#allocation5], 0
    // Predicated region
    $region2: #{tpu_custom_call.1} parent=1 // pred_check
      _
    $region3: #{tpu_custom_call.1} parent=1 // pred_check_branch
      %9 = sbr.rel (0) target = $region5
    $region4: #{tpu_custom_call.1} parent=1 // pred_region
      _
    $region5: #{tpu_custom_call.1} parent=1 // pred_fallthru
      _
    %p10 = scmp.eq.s32.totalorder 0, 0
    // Predicated region
    $region6: #{tpu_custom_call.1} parent=1 // pred_check
      %p11 = pneg %p10
    $region7: #{tpu_custom_call.1} parent=1 // pred_check_branch
      %13 = sbr.rel (%p11) target = $region9
    $region8: #{tpu_custom_call.1} parent=1 // pred_region
      // Predicated region
      $region10: #{tpu_custom_call.1} parent=8 // pred_check
        _
      $region11: #{tpu_custom_call.1} parent=8 // pred_check_branch
        %15 = sbr.rel target = $region13
      $region12: #{tpu_custom_call.1} parent=8 // pred_region
        %16 = sst [smem:[#allocation8]] [#allocation7]
        %17 = sst [smem:[#allocation9]] [#allocation6]
      $region13: #{tpu_custom_call.1} parent=8 // pred_fallthru
        _
      %19 = shalt.err (0)
      %s21 = sshll.u32 %s1, 4
      %s22 = int_to_ptr.hbm [resolvable:$true] %s21
      %s23 = sshll.u32 [#allocation2], 4
      %s24 = int_to_ptr.vmem [resolvable:$true] %s23
      %26 = dma.hbm_to_vmem [thread:$0]  %s22, 512, %s24, [#allocation3]
      %s27 = smul.u32 32, 1
      %s28 = sshll.u32 %s27, 4
      %29 = dma.done [#allocation3], %s28
    $region9: #{tpu_custom_call.1} parent=1 // pred_fallthru
      _
    %v30 = vld [vmem:[%s0] sm:$0xff]
    %v31 = vld [vmem:[%s0 + $0x8] sm:$0xff]
    %v32 = vlaneseq
    %v33 = vand.u32 %v32, 127
    %34 = vset.pattern.permute.xlu0 0
    %35 = vperm.xlu0 %34, %v30
    %v36 = vpop.permute.xlu0 %35
    %37 = vset.pattern.permute.xlu0 0
    %38 = vperm.xlu0 %37, %v31
    %v39 = vpop.permute.xlu0 %38
    %vm40 = vcmp.eq.s32.totalorder %v36, %v33
    %vm41 = vcmp.eq.s32.totalorder %v39, %v33
    %v42 = vsel %vm40, 1, 0
    %v43 = vsel %vm41, 1, 0
    %v44 = vcvt.s32.f32 %v42
    %v45 = vcvt.s32.f32 %v43
    %v46 = vld [vmem:[#allocation2] sm:$0xff]
    %v47 = vld [vmem:[#allocation2 + $0x8] sm:$0xff]
    %v48 = vld [vmem:[#allocation2 + $0x10] sm:$0xff]
    %v49 = vld [vmem:[#allocation2 + $0x18] sm:$0xff]
    %vm50 = vcmask 261120
    %v52 = vsel %vm50, %v44, 0
    %v55 = vsel %vm50, %v45, 0
    %57 = vmatpush.msra.mxu0 0.0
    %58 = vmatpush.msra.mxu0 0.0
    %59 = vmatpush.msra.mxu0 0.0
    %60 = vmatpush.msra.mxu0 0.0
    %61 = vmatpush.msra.mxu0 0.0
    %62 = vmatpush.msra.mxu0 0.0
    %63 = vmatpush.msra.mxu0 0.0
    %64 = vmatpush.msra.mxu0 0.0
    %65 = vmatpush.msra.mxu0 0.0
    %66 = vmatpush.msra.mxu0 0.0
    %67 = vmatpush.msra.mxu0 0.0
    %68 = vmatpush.msra.mxu0 0.0
    %69 = vmatpush.msra.mxu0 %v49
    %70 = vmatpush.msra.mxu0 %v48
    %71 = vmatpush.msra.mxu0 %v47
    %72 = vmatpush.msra.mxu0 %v46
    %73 = vmatmul.f32.gmra.mxu0 %v52
    %v74 = vpop.f32.mrf.mxu0
    %v75 = vadd.f32 0.0, %v74
    %76 = vmatmul.f32.gmra.mxu0 %v55
    %v77 = vpop.f32.mrf.mxu0
    %v78 = vadd.f32 0.0, %v77
    %79 = vdwg.mxu0
    %80 = vst [vmem:[#allocation4] sm:$0xff] %v75
    %81 = vst [vmem:[#allocation4 + $0x8] sm:$0xff] %v78
    // Predicated region
    $region14: #{tpu_custom_call.1} parent=1 // pred_check
      _
    $region15: #{tpu_custom_call.1} parent=1 // pred_check_branch
      %83 = sbr.rel (0) target = $region17
    $region16: #{tpu_custom_call.1} parent=1 // pred_region
      %85 = vsyncadd [#allocation5], 0
      %s86 = sshll.u32 [#allocation4], 4
      %s87 = int_to_ptr.vmem [resolvable:$true] %s86
      %s88 = sshll.u32 %s2, 4
      %s89 = int_to_ptr.hbm [resolvable:$true] %s88
      %94 = dma.vmem_to_hbm [thread:$0]  %s87, 256, %s89, [#allocation5], 128, 128, 8
    $region17: #{tpu_custom_call.1} parent=1 // pred_fallthru
      _
    // Predicated region
    $region18: #{tpu_custom_call.1} parent=1 // pred_check
      _
    $region19: #{tpu_custom_call.1} parent=1 // pred_check_branch
      %96 = sbr.rel (0) target = $region21
    $region20: #{tpu_custom_call.1} parent=1 // pred_region
      %98 = dma.done [#allocation5], 256
    $region21: #{tpu_custom_call.1} parent=1 // pred_fallthru
      _
    %99 = vsyncpa [#allocation5], 1
  %100 = vsyncmov [#allocation3]
  %s101 = vpop.sfrf %100
  %p102 = scmp.eq.s32.totalorder %s101, 0
  %p103 = pneg %p102
  %105 = shalt.err (%p103)

</llo_original>
